<compile_context>
chip_gen: v5e
topology: v5e:2x2
jax: 0.10.0
libtpu: 0.0.40
codegen_flags: <defaults>
</compile_context>

<pallas_src>
import functools

import jax
import jax.numpy as jnp
from jax.experimental import pallas as pl
from jax.experimental.pallas import tpu as pltpu


def _ffn_kernel(x_ref, w1_ref, b1_ref, w2_ref, b2_ref, o_ref):
    # fc1 on the (TILE_M, D) row tile: (TILE_M, D) @ (D, H) -> f32 accum.
    h = jnp.dot(x_ref[...], w1_ref[...], preferred_element_type=jnp.float32)
    # Bias + ReLU in f32 on the VPU.
    h = jnp.maximum(h + b1_ref[...].astype(jnp.float32), 0.0)
    # fc2: (TILE_M, H) @ (H, D) -> f32 accum; cast only the MXU operand.
    out = jnp.dot(h.astype(w2_ref.dtype), w2_ref[...],
                  preferred_element_type=jnp.float32)
    o_ref[...] = (out + b2_ref[...].astype(jnp.float32)).astype(o_ref.dtype)


def _round_up(x, m):
    return ((x + m - 1) // m) * m


@functools.partial(jax.jit, static_argnames=("tile_m",))
def position_wise_feed_forward(x, w1, b1, w2, b2, *, tile_m=256):
    """x: (B, S, D).  w1: (D, H), b1: (H,), w2: (H, D), b2: (D,)."""
    B, S, D = x.shape
    H = w1.shape[1]
    M = B * S
    itemsize = jnp.dtype(x.dtype).itemsize

    # Lane / sublane alignment: features -> multiples of 128; rows -> 8 (f32)
    # or 16 (16-bit dtypes).
    sub = 16 if itemsize == 2 else 8
    D_pad = _round_up(D, 128)
    H_pad = _round_up(H, 128)

    # Row tile: multiple of `sub`, no bigger than needed for small inputs.
    tile_m_eff = min(_round_up(tile_m, sub), _round_up(M, sub))
    M_pad = _round_up(M, tile_m_eff)
    num_tiles = M_pad // tile_m_eff

    # Zero-pad (exact: padded rows/cols contribute nothing and are sliced off).
    x2d = jnp.pad(x.reshape(M, D), ((0, M_pad - M), (0, D_pad - D)))
    w1p = jnp.pad(w1, ((0, D_pad - D), (0, H_pad - H)))
    b1p = jnp.pad(b1.reshape(1, H), ((0, 0), (0, H_pad - H)))
    w2p = jnp.pad(w2, ((0, H_pad - H), (0, D_pad - D)))
    b2p = jnp.pad(b2.reshape(1, D), ((0, 0), (0, D_pad - D)))

    # VMEM budget: resident weights (double-buffered worst case) + pipelined
    # x/out tiles + f32 intermediates + margin.  Clamp to [32, 64] MiB so the
    # limit is valid on v7x (64 MiB VMEM) as well as v5e/v6e (128 MiB).
    vmem_need = (
        2 * (2 * D_pad * H_pad + H_pad + D_pad) * itemsize
        + 4 * tile_m_eff * D_pad * itemsize
        + tile_m_eff * (H_pad + D_pad) * 4
        + (4 << 20)
    )
    vmem_limit = int(min(max(vmem_need, 32 << 20), 64 << 20))

    cost = pl.CostEstimate(
        flops=4 * M_pad * D_pad * H_pad,  # two matmuls
        transcendentals=0,
        bytes_accessed=int(
            (2 * M_pad * D_pad + 2 * D_pad * H_pad + H_pad + D_pad) * itemsize
        ),
    )

    out2d = pl.pallas_call(
        _ffn_kernel,
        out_shape=jax.ShapeDtypeStruct((M_pad, D_pad), x.dtype),
        grid_spec=pltpu.PrefetchScalarGridSpec(
            num_scalar_prefetch=0,
            grid=(num_tiles,),
            in_specs=[
                pl.BlockSpec((tile_m_eff, D_pad), lambda i: (i, 0)),  # x tile
                pl.BlockSpec((D_pad, H_pad), lambda i: (0, 0)),       # w1 (resident)
                pl.BlockSpec((1, H_pad), lambda i: (0, 0)),           # b1
                pl.BlockSpec((H_pad, D_pad), lambda i: (0, 0)),       # w2 (resident)
                pl.BlockSpec((1, D_pad), lambda i: (0, 0)),           # b2
            ],
            out_specs=pl.BlockSpec((tile_m_eff, D_pad), lambda i: (i, 0)),
        ),
        compiler_params=pltpu.CompilerParams(
            dimension_semantics=("parallel",),
            vmem_limit_bytes=vmem_limit,
        ),
        cost_estimate=cost,
    )(x2d, w1p, b1p, w2p, b2p)

    return out2d[:M, :D].reshape(B, S, D)


def init_params(key, input_dim, inner_dim, dtype=jnp.float32):
    """Deterministic init mimicking nn.Linear (uniform in +/- 1/sqrt(fan_in))."""
    k1, k2, k3, k4 = jax.random.split(key, 4)
    bound1 = 1.0 / (input_dim ** 0.5)
    bound2 = 1.0 / (inner_dim ** 0.5)
    # Stored as (in, out) so the kernel does x @ W.
    w1 = jax.random.uniform(k1, (input_dim, inner_dim), dtype,
                            minval=-bound1, maxval=bound1)
    b1 = jax.random.uniform(k2, (inner_dim,), dtype,
                            minval=-bound1, maxval=bound1)
    w2 = jax.random.uniform(k3, (inner_dim, input_dim), dtype,
                            minval=-bound2, maxval=bound2)
    b2 = jax.random.uniform(k4, (input_dim,), dtype,
                            minval=-bound2, maxval=bound2)
    return w1, b1, w2, b2


if __name__ == "__main__":
    key = jax.random.PRNGKey(0)

    # Test 1: small shapes matching the module's typical usage
    # (exercises the feature/row padding path).
    k_x, k_p = jax.random.split(key)
    batch, seq, input_dim, inner_dim = 2, 8, 32, 64
    x = jax.random.normal(k_x, (batch, seq, input_dim), dtype=jnp.float32)
    w1, b1, w2, b2 = init_params(k_p, input_dim, inner_dim)

    out = position_wise_feed_forward(x, w1, b1, w2, b2)
    out = jax.block_until_ready(out)
    ref = jnp.maximum(x @ w1 + b1, 0.0) @ w2 + b2
    assert out.shape == (batch, seq, input_dim)
    assert jnp.allclose(out, ref, atol=1e-5, rtol=1e-5)

    # Test 2: lane-aligned shapes with multiple row tiles (exercises the tiled,
    # pipelined path with resident weights).
    k_x2, k_p2 = jax.random.split(jax.random.PRNGKey(1))
    b2_, s2_, d2_, h2_ = 2, 256, 128, 256
    x2 = jax.random.normal(k_x2, (b2_, s2_, d2_), dtype=jnp.float32)
    w1b, b1b, w2b, b2b = init_params(k_p2, d2_, h2_)

    out2 = position_wise_feed_forward(x2, w1b, b1b, w2b, b2b)
    out2 = jax.block_until_ready(out2)
    ref2 = jnp.maximum(x2 @ w1b + b1b, 0.0) @ w2b + b2b
    assert out2.shape == (b2_, s2_, d2_)
    assert jnp.allclose(out2, ref2, atol=1e-3, rtol=1e-3)

    print("KERNEL_OK")
</pallas_src>

<mosaic_0001>
module attributes {stable_mosaic.version = 11 : i64} {
  func.func @_ffn_kernel(%arg0: i32, %arg1: memref<16x128xf32, #tpu.memory_space<vmem>>, %arg2: memref<128x128xf32, #tpu.memory_space<vmem>>, %arg3: memref<1x128xf32, #tpu.memory_space<vmem>>, %arg4: memref<128x128xf32, #tpu.memory_space<vmem>>, %arg5: memref<1x128xf32, #tpu.memory_space<vmem>>, %arg6: memref<16x128xf32, #tpu.memory_space<vmem>>) attributes {dimension_semantics = [#tpu.dimension_semantics<parallel>], iteration_bounds = array<i64: 1>, scalar_prefetch = 0 : i64, scratch_operands = 0 : i64, tpu.core_type = #tpu.core_type<tc>, window_params = [{transform_indices = @transform_0, window_bounds = array<i64: 16, 128>}, {pipeline_mode = #tpu.pipeline_mode<synchronous>, transform_indices = @transform_1, window_bounds = array<i64: 128, 128>}, {pipeline_mode = #tpu.pipeline_mode<synchronous>, transform_indices = @transform_2, window_bounds = array<i64: 1, 128>}, {pipeline_mode = #tpu.pipeline_mode<synchronous>, transform_indices = @transform_3, window_bounds = array<i64: 128, 128>}, {pipeline_mode = #tpu.pipeline_mode<synchronous>, transform_indices = @transform_4, window_bounds = array<i64: 1, 128>}, {transform_indices = @transform_5, window_bounds = array<i64: 16, 128>}]} {
    %c0 = arith.constant 0 : index
    %c0_0 = arith.constant 0 : index
    %0 = vector.load %arg1[%c0, %c0_0] : memref<16x128xf32, #tpu.memory_space<vmem>>, vector<16x128xf32>
    %c0_1 = arith.constant 0 : index
    %c0_2 = arith.constant 0 : index
    %1 = vector.load %arg2[%c0_1, %c0_2] : memref<128x128xf32, #tpu.memory_space<vmem>>, vector<128x128xf32>
    %cst = arith.constant dense<0.000000e+00> : vector<16x128xf32>
    %2 = tpu.matmul %0, %1, %cst {dimension_numbers = #tpu.dot_dimension_numbers<[1], [0], [0], [1], [0, 0, 1, 1], [], []>} : vector<16x128xf32>, vector<128x128xf32>, vector<16x128xf32> -> vector<16x128xf32>
    %c0_3 = arith.constant 0 : index
    %c0_4 = arith.constant 0 : index
    %3 = vector.load %arg3[%c0_3, %c0_4] : memref<1x128xf32, #tpu.memory_space<vmem>>, vector<1x128xf32>
    %4 = vector.broadcast %3 : vector<1x128xf32> to vector<16x128xf32>
    %5 = arith.addf %2, %4 : vector<16x128xf32>
    %cst_5 = arith.constant 0.000000e+00 : f32
    %6 = vector.broadcast %cst_5 : f32 to vector<16x128xf32>
    %7 = arith.maximumf %5, %6 : vector<16x128xf32>
    %c0_6 = arith.constant 0 : index
    %c0_7 = arith.constant 0 : index
    %8 = vector.load %arg4[%c0_6, %c0_7] : memref<128x128xf32, #tpu.memory_space<vmem>>, vector<128x128xf32>
    %cst_8 = arith.constant dense<0.000000e+00> : vector<16x128xf32>
    %9 = tpu.matmul %7, %8, %cst_8 {dimension_numbers = #tpu.dot_dimension_numbers<[1], [0], [0], [1], [0, 0, 1, 1], [], []>} : vector<16x128xf32>, vector<128x128xf32>, vector<16x128xf32> -> vector<16x128xf32>
    %c0_9 = arith.constant 0 : index
    %c0_10 = arith.constant 0 : index
    %10 = vector.load %arg5[%c0_9, %c0_10] : memref<1x128xf32, #tpu.memory_space<vmem>>, vector<1x128xf32>
    %11 = vector.broadcast %10 : vector<1x128xf32> to vector<16x128xf32>
    %12 = arith.addf %9, %11 : vector<16x128xf32>
    %c0_11 = arith.constant 0 : index
    %c0_12 = arith.constant 0 : index
    %13 = vector.load %arg6[%c0_11, %c0_12] : memref<16x128xf32, #tpu.memory_space<vmem>>, vector<16x128xf32>
    tpu.vector_store %arg6[%c0_11, %c0_12], %12 {strides = array<i32>} : memref<16x128xf32, #tpu.memory_space<vmem>>, vector<16x128xf32>,
    return
  }
  func.func @transform_0(%arg0: i32) -> (i32, i32) {
    %c0_i32 = arith.constant 0 : i32
    %c0_i32_0 = arith.constant 0 : i32
    return %arg0, %c0_i32 : i32, i32
  }
  func.func @transform_1(%arg0: i32) -> (i32, i32) {
    %c0_i32 = arith.constant 0 : i32
    %c0_i32_0 = arith.constant 0 : i32
    %c0_i32_1 = arith.constant 0 : i32
    return %c0_i32, %c0_i32_0 : i32, i32
  }
  func.func @transform_2(%arg0: i32) -> (i32, i32) {
    %c0_i32 = arith.constant 0 : i32
    %c0_i32_0 = arith.constant 0 : i32
    %c0_i32_1 = arith.constant 0 : i32
    return %c0_i32, %c0_i32_0 : i32, i32
  }
  func.func @transform_3(%arg0: i32) -> (i32, i32) {
    %c0_i32 = arith.constant 0 : i32
    %c0_i32_0 = arith.constant 0 : i32
    %c0_i32_1 = arith.constant 0 : i32
    return %c0_i32, %c0_i32_0 : i32, i32
  }
  func.func @transform_4(%arg0: i32) -> (i32, i32) {
    %c0_i32 = arith.constant 0 : i32
    %c0_i32_0 = arith.constant 0 : i32
    %c0_i32_1 = arith.constant 0 : i32
    return %c0_i32, %c0_i32_0 : i32, i32
  }
  func.func @transform_5(%arg0: i32) -> (i32, i32) {
    %c0_i32 = arith.constant 0 : i32
    %c0_i32_0 = arith.constant 0 : i32
    return %arg0, %c0_i32 : i32, i32
  }
}

</mosaic_0001>

<llo_original>
// kernel: position_wise_feed_forward.1
$region0: #{position_wise_feed_forward.1}
  #allocation0 [shape = 'u32[]', space=smem, size = 0x4, offset = 0x4, fixed_abs, tag = 'smem constant byte address 0x4 - core index']
  #allocation1 [shape = 'u32[72,128]{1,0:T(1,128)}', space=vmem, size = 0x9000, scoped, tag = 'internal scratch']
  %s0 = inlined_call_operand.vmem [shape: f32[16,128], index: 0, kind: input, shape index: {}]
  %s1 = inlined_call_operand.vmem [shape: f32[128,128], index: 1, kind: input, shape index: {}]
  %s2 = inlined_call_operand.vmem [shape: f32[1,128], index: 2, kind: input, shape index: {}]
  %s3 = inlined_call_operand.vmem [shape: f32[128,128], index: 3, kind: input, shape index: {}]
  %s4 = inlined_call_operand.vmem [shape: f32[1,128], index: 4, kind: input, shape index: {}]
  %s5 = inlined_call_operand.vmem [shape: f32[16,128], index: 5, kind: output, shape index: {}]
  %s6 = sld [smem:[#allocation0]]
  $region30: #{position_wise_feed_forward.1} parent=0
    _
  %s8 = ssub.s32 1, %s6
  %s9 = scalar_select 0, %s8, %s6
  // Predicated region
  $region2: #{position_wise_feed_forward.1} parent=0 // pred_check
    _
  $region3: #{position_wise_feed_forward.1} parent=0 // pred_check_branch
    %11 = sbr.rel (0) target = $region5
  $region4: #{position_wise_feed_forward.1} parent=0 // pred_region
    _
  $region5: #{position_wise_feed_forward.1} parent=0 // pred_fallthru
    _
  // Predicated region
  $region6: #{position_wise_feed_forward.1} parent=0 // pred_check
    _
  $region7: #{position_wise_feed_forward.1} parent=0 // pred_check_branch
    %13 = sbr.rel (0) target = $region9
  $region8: #{position_wise_feed_forward.1} parent=0 // pred_region
    _
  $region9: #{position_wise_feed_forward.1} parent=0 // pred_fallthru
    _
  // Predicated region
  $region10: #{position_wise_feed_forward.1} parent=0 // pred_check
    _
  $region11: #{position_wise_feed_forward.1} parent=0 // pred_check_branch
    %15 = sbr.rel (0) target = $region13
  $region12: #{position_wise_feed_forward.1} parent=0 // pred_region
    _
  $region13: #{position_wise_feed_forward.1} parent=0 // pred_fallthru
    _
  // Predicated region
  $region14: #{position_wise_feed_forward.1} parent=0 // pred_check
    _
  $region15: #{position_wise_feed_forward.1} parent=0 // pred_check_branch
    %17 = sbr.rel (0) target = $region17
  $region16: #{position_wise_feed_forward.1} parent=0 // pred_region
    _
  $region17: #{position_wise_feed_forward.1} parent=0 // pred_fallthru
    _
  // Predicated region
  $region18: #{position_wise_feed_forward.1} parent=0 // pred_check
    _
  $region19: #{position_wise_feed_forward.1} parent=0 // pred_check_branch
    %19 = sbr.rel (0) target = $region21
  $region20: #{position_wise_feed_forward.1} parent=0 // pred_region
    _
  $region21: #{position_wise_feed_forward.1} parent=0 // pred_fallthru
    _
  %v20 = vld [vmem:[%s0] sm:$0xff]
  %v21 = vld [vmem:[%s0 + $0x8] sm:$0xff]
  %v22 = vld [vmem:[%s1] sm:$0xff]
  %v23 = vld [vmem:[%s1 + $0x8] sm:$0xff]
  %v24 = vld [vmem:[%s1 + $0x10] sm:$0xff]
  %v25 = vld [vmem:[%s1 + $0x18] sm:$0xff]
  %v26 = vld [vmem:[%s1 + $0x20] sm:$0xff]
  %v27 = vld [vmem:[%s1 + $0x28] sm:$0xff]
  %v28 = vld [vmem:[%s1 + $0x30] sm:$0xff]
  %v29 = vld [vmem:[%s1 + $0x38] sm:$0xff]
  %v30 = vld [vmem:[%s1 + $0x40] sm:$0xff]
  %v31 = vld [vmem:[%s1 + $0x48] sm:$0xff]
  %v32 = vld [vmem:[%s1 + $0x50] sm:$0xff]
  %v33 = vld [vmem:[%s1 + $0x58] sm:$0xff]
  %v34 = vld [vmem:[%s1 + $0x60] sm:$0xff]
  %v35 = vld [vmem:[%s1 + $0x68] sm:$0xff]
  %v36 = vld [vmem:[%s1 + $0x70] sm:$0xff]
  %v37 = vld [vmem:[%s1 + $0x78] sm:$0xff]
  %v38 = vld [vmem:[%s2] sm:$0x1]
  %v40 = vperm.slane %v38, 0
  %42 = vmatpush.msra.mxu0 %v37
  %43 = vmatpush.msra.mxu0 %v36
  %44 = vmatpush.msra.mxu0 %v35
  %45 = vmatpush.msra.mxu0 %v34
  %46 = vmatpush.msra.mxu0 %v33
  %47 = vmatpush.msra.mxu0 %v32
  %48 = vmatpush.msra.mxu0 %v31
  %49 = vmatpush.msra.mxu0 %v30
  %50 = vmatpush.msra.mxu0 %v29
  %51 = vmatpush.msra.mxu0 %v28
  %52 = vmatpush.msra.mxu0 %v27
  %53 = vmatpush.msra.mxu0 %v26
  %54 = vmatpush.msra.mxu0 %v25
  %55 = vmatpush.msra.mxu0 %v24
  %56 = vmatpush.msra.mxu0 %v23
  %57 = vmatpush.msra.mxu0 %v22
  %58 = vmatmul.f32.gmra.mxu0 %v20
  %v59 = vpop.f32.mrf.mxu0
  %v60 = vadd.f32 %v40, %v59
  %61 = vmatmul.f32.gmra.mxu0 %v21
  %v62 = vpop.f32.mrf.mxu0
  %v63 = vadd.f32 %v40, %v62
  %64 = vdwg.mxu0
  %v65 = vmax.f32 %v60, 0.0
  %v66 = vmax.f32 %v63, 0.0
  %v67 = vld [vmem:[%s3] sm:$0xff]
  %v68 = vld [vmem:[%s3 + $0x8] sm:$0xff]
  %v69 = vld [vmem:[%s3 + $0x10] sm:$0xff]
  %v70 = vld [vmem:[%s3 + $0x18] sm:$0xff]
  %v71 = vld [vmem:[%s3 + $0x20] sm:$0xff]
  %v72 = vld [vmem:[%s3 + $0x28] sm:$0xff]
  %v73 = vld [vmem:[%s3 + $0x30] sm:$0xff]
  %v74 = vld [vmem:[%s3 + $0x38] sm:$0xff]
  %v75 = vld [vmem:[%s3 + $0x40] sm:$0xff]
  %v76 = vld [vmem:[%s3 + $0x48] sm:$0xff]
  %v77 = vld [vmem:[%s3 + $0x50] sm:$0xff]
  %v78 = vld [vmem:[%s3 + $0x58] sm:$0xff]
  %v79 = vld [vmem:[%s3 + $0x60] sm:$0xff]
  %v80 = vld [vmem:[%s3 + $0x68] sm:$0xff]
  %v81 = vld [vmem:[%s3 + $0x70] sm:$0xff]
  %v82 = vld [vmem:[%s3 + $0x78] sm:$0xff]
  %v83 = vld [vmem:[%s4] sm:$0x1]
  %v85 = vperm.slane %v83, 0
  %87 = vmatpush.msra.mxu0 %v82
  %88 = vmatpush.msra.mxu0 %v81
  %89 = vmatpush.msra.mxu0 %v80
  %90 = vmatpush.msra.mxu0 %v79
  %91 = vmatpush.msra.mxu0 %v78
  %92 = vmatpush.msra.mxu0 %v77
  %93 = vmatpush.msra.mxu0 %v76
  %94 = vmatpush.msra.mxu0 %v75
  %95 = vmatpush.msra.mxu0 %v74
  %96 = vmatpush.msra.mxu0 %v73
  %97 = vmatpush.msra.mxu0 %v72
  %98 = vmatpush.msra.mxu0 %v71
  %99 = vmatpush.msra.mxu0 %v70
  %100 = vmatpush.msra.mxu0 %v69
  %101 = vmatpush.msra.mxu0 %v68
  %102 = vmatpush.msra.mxu0 %v67
  %103 = vmatmul.f32.gmra.mxu0 %v65
  %v104 = vpop.f32.mrf.mxu0
  %v105 = vadd.f32 %v85, %v104
  %106 = vmatmul.f32.gmra.mxu0 %v66
  %v107 = vpop.f32.mrf.mxu0
  %v108 = vadd.f32 %v85, %v107
  %109 = vdwg.mxu0
  %110 = vst [vmem:[%s5] sm:$0xff] %v105
  %111 = vst [vmem:[%s5 + $0x8] sm:$0xff] %v108
  // Predicated region
  $region22: #{position_wise_feed_forward.1} parent=0 // pred_check
    _
  $region23: #{position_wise_feed_forward.1} parent=0 // pred_check_branch
    %113 = sbr.rel (0) target = $region25
  $region24: #{position_wise_feed_forward.1} parent=0 // pred_region
    _
  $region25: #{position_wise_feed_forward.1} parent=0 // pred_fallthru
    _
  // Predicated region
  $region26: #{position_wise_feed_forward.1} parent=0 // pred_check
    _
  $region27: #{position_wise_feed_forward.1} parent=0 // pred_check_branch
    %115 = sbr.rel (0) target = $region29
  $region28: #{position_wise_feed_forward.1} parent=0 // pred_region
    _
  $region29: #{position_wise_feed_forward.1} parent=0 // pred_fallthru
    _

</llo_original>
